<compile_context>
chip_gen: v5e
topology: v5e:2x2
jax: 0.10.0
libtpu: 0.0.40
codegen_flags: <defaults>
</compile_context>

<pallas_src>
import functools
import math

import jax
import jax.numpy as jnp
from jax import lax
from jax.experimental import pallas as pl
from jax.experimental.pallas import tpu as pltpu

_LOG_EPS = math.log(1e-6)  # torch clamp(1e-6, 1) lower bound, in log space


def _focal_loss_kernel(x_ref, t_ref, *rest, gamma, n_rows, use_alpha, exp_in_bf16):
    """Writes the partial focal-loss sum of this row tile to out_ref (1,1,1)."""
    if use_alpha:
        a_ref, out_ref = rest
    else:
        (out_ref,) = rest

    x = x_ref[...].astype(jnp.float32)        # (TN, C) logits, f32 compute
    t = t_ref[...]                            # (TN, 1) int32 class ids
    TN, C = x.shape

    ones_c = jnp.ones((C, 1), jnp.float32)    # constant RHS for MXU lane-sums

    # --- logsumexp: row max on the XLU, lane-sum on the (otherwise idle) MXU ---
    m = jnp.max(x, axis=1, keepdims=True)                               # (TN, 1)
    xs = x - m
    if exp_in_bf16:
        # v6e/v7x only: bf16 EUP exp + native bf16 MXU input (f32 accumulate).
        e = jnp.exp(xs.astype(jnp.bfloat16))
        se = jnp.dot(e, ones_c.astype(jnp.bfloat16),
                     preferred_element_type=jnp.float32)                # (TN, 1)
    else:
        e = jnp.exp(xs)
        se = jnp.dot(e, ones_c, preferred_element_type=jnp.float32)     # (TN, 1)
    lse = m + jnp.log(se)                                               # (TN, 1)

    # --- target-logit gather: one-hot mask built once, reduced on the MXU ---
    col = lax.broadcasted_iota(jnp.int32, (TN, C), 1)
    mask_f = (col == t).astype(jnp.float32)                             # (TN, C)
    x_t = jnp.dot(x * mask_f, ones_c, preferred_element_type=jnp.float32)

    # log p_t with torch's clamp(1e-6, 1.0) applied in log space.
    log_p = jnp.clip(x_t - lse, jnp.float32(_LOG_EPS), jnp.float32(0.0))
    p_t = jnp.exp(log_p)
    one_minus = 1.0 - p_t

    # (1 - p_t)^gamma : integer gamma -> pure VPU multiplies (default 2 -> one mul).
    g = float(gamma)
    if g == 2.0:
        focal = one_minus * one_minus
    elif g == int(g) and 0 <= int(g) <= 8:
        gi = int(g)
        if gi == 0:
            focal = jnp.ones_like(one_minus)
        else:
            focal = one_minus
            for _ in range(gi - 1):
                focal = focal * one_minus
    else:
        focal = jnp.power(one_minus, jnp.float32(g))

    loss = -(focal * log_p)                                             # (TN, 1)

    if use_alpha:
        # alpha[targets] via the same one-hot mask: (TN,C) @ (C,1) on the MXU.
        alpha_t = jnp.dot(mask_f, a_ref[...].astype(jnp.float32),
                          preferred_element_type=jnp.float32)
        loss = loss * alpha_t

    # Mask rows past the true batch size (last tile may be padded).
    row = pl.program_id(0) * TN + lax.broadcasted_iota(jnp.int32, (TN, 1), 0)
    loss = jnp.where(row < n_rows, loss, 0.0)

    out_ref[...] = jnp.sum(loss).reshape(1, 1, 1)


def _vmem_limit_bytes():
    """Generation-aware scoped-VMEM limit (v7x has only 64 MiB per TensorCore)."""
    cap = None
    try:
        info = pltpu.get_tpu_info()
        cap = int(getattr(info, "vmem_capacity_bytes", 0)) or None
    except Exception:
        cap = None
    if cap is None:
        cap = 64 * 1024 * 1024      # conservative fallback (safe on v7x)
    # 0.75 * 64 MiB = 48 MiB on v7x; capped at 96 MiB on v5e/v6e (128 MiB VMEM).
    return min(int(0.75 * cap), 96 * 1024 * 1024)


def _choose_tile_rows(n, c, in_itemsize, vmem_limit_bytes):
    """Largest multiple-of-8 row tile sized from the real per-step VMEM footprint."""
    c_pad = ((max(int(c), 1) + 127) // 128) * 128   # lane-padded class dim
    # Per tile-row bytes:
    #   * 2x double-buffered logits block (native dtype, lane padded)
    #   * 2x double-buffered (TN,1) int32 targets block (padded to 128 lanes)
    #   * ~8 full-tile f32 temporaries materialized by the kernel body
    per_row = 2 * c_pad * int(in_itemsize) + 2 * 128 * 4 + 8 * c_pad * 4
    budget = int(0.55 * vmem_limit_bytes)
    rows = max(8, (budget // per_row) // 8 * 8)
    n_pad = ((n + 7) // 8) * 8
    rows = min(rows, n_pad)
    # Keep >=2 row tiles for non-trivial N so both v7x TensorCores get work.
    if n >= 256 and rows >= n_pad:
        half = (n_pad + 1) // 2
        rows = max(8, ((half + 7) // 8) * 8)
    return max(8, rows)


def focal_loss(inputs, targets, alpha=None, gamma=2.0, size_average=True,
               tile_rows=None, exp_in_bf16=False):
    """inputs: (N, C) logits (any float dtype); targets: (N,) int; alpha: (C,1)/None."""
    N, C = inputs.shape
    t2 = targets.reshape(N, 1).astype(jnp.int32)
    use_alpha = alpha is not None
    itemsize = jnp.dtype(inputs.dtype).itemsize

    vmem_limit = _vmem_limit_bytes()
    if tile_rows is None:
        tile_rows = _choose_tile_rows(N, C, itemsize, vmem_limit)
    TN = max(8, (int(tile_rows) // 8) * 8)
    num_tiles = pl.cdiv(N, TN)

    kernel = functools.partial(_focal_loss_kernel, gamma=float(gamma),
                               n_rows=N, use_alpha=use_alpha,
                               exp_in_bf16=bool(exp_in_bf16))

    in_specs = [
        pl.BlockSpec((TN, C), lambda i: (i, 0)),   # logits row tile (native dtype)
        pl.BlockSpec((TN, 1), lambda i: (i, 0)),   # targets row tile
    ]
    args = [inputs, t2]
    if use_alpha:
        a2 = jnp.asarray(alpha, dtype=jnp.float32).reshape(C, 1)
        in_specs.append(pl.BlockSpec((C, 1), lambda i: (0, 0)))  # resident alpha
        args.append(a2)

    cost = pl.CostEstimate(
        flops=8 * N * C,
        transcendentals=N * C + 3 * N,
        bytes_accessed=N * C * itemsize + N * 4 + num_tiles * 4
                       + (C * 4 if use_alpha else 0),
    )

    partials = pl.pallas_call(
        kernel,
        out_shape=jax.ShapeDtypeStruct((num_tiles, 1, 1), jnp.float32),
        grid=(num_tiles,),
        in_specs=in_specs,
        out_specs=pl.BlockSpec((1, 1, 1), lambda i: (i, 0, 0)),
        compiler_params=pltpu.CompilerParams(
            dimension_semantics=("parallel",),
            vmem_limit_bytes=vmem_limit),
        cost_estimate=cost,
    )(*args)

    total = jnp.sum(partials)
    return total / jnp.float32(N) if size_average else total


def focal_loss_ref(inputs, targets, alpha, gamma=2.0, size_average=True):
    """Pure-JAX reference mirroring the PyTorch forward (softmax branch)."""
    x = inputs.astype(jnp.float32)
    p = jnp.clip(jax.nn.softmax(x, axis=1), 1e-6, 1.0)
    onehot = jax.nn.one_hot(targets, x.shape[1], dtype=p.dtype)
    probs = jnp.sum(p * onehot, axis=1, keepdims=True)
    if alpha is None:
        a = jnp.ones((x.shape[0], 1), jnp.float32)
    else:
        a = jnp.asarray(alpha, jnp.float32).reshape(-1)[targets].reshape(-1, 1)
    batch_loss = -a * jnp.power(1.0 - probs, gamma) * jnp.log(probs)
    return jnp.mean(batch_loss) if size_average else jnp.sum(batch_loss)


if __name__ == "__main__":
    key = jax.random.PRNGKey(0)
    k1, k2, k3, k4, k5 = jax.random.split(key, 5)

    # --- Test 1: default module config (alpha=None -> ones), N not multiple of 8 ---
    N, C = 12, 16
    x = jax.random.normal(k1, (N, C), dtype=jnp.float32)
    t = jax.random.randint(k2, (N,), 0, C, dtype=jnp.int32)
    got = jax.block_until_ready(
        focal_loss(x, t, alpha=None, gamma=2.0, size_average=True))
    want = focal_loss_ref(x, t, None, gamma=2.0, size_average=True)
    assert jnp.allclose(got, want, rtol=1e-5, atol=1e-5), (got, want)

    # --- Test 2: non-uniform alpha (MXU gather), bf16 logits, sum reduction ---
    alpha = jax.random.uniform(k3, (C, 1), dtype=jnp.float32,
                               minval=0.25, maxval=1.0)
    x_bf16 = x.astype(jnp.bfloat16)
    got2 = jax.block_until_ready(
        focal_loss(x_bf16, t, alpha=alpha, gamma=2.0, size_average=False))
    want2 = focal_loss_ref(x_bf16.astype(jnp.float32), t, alpha,
                           gamma=2.0, size_average=False)
    assert jnp.allclose(got2, want2, rtol=1e-5, atol=1e-5), (got2, want2)

    # --- Test 3: multi-tile path (forced small tile) with a padded last tile ---
    N3, C3 = 200, 40
    x3 = jax.random.normal(k4, (N3, C3), dtype=jnp.float32)
    t3 = jax.random.randint(k5, (N3,), 0, C3, dtype=jnp.int32)
    got3 = jax.block_until_ready(
        focal_loss(x3, t3, alpha=None, gamma=2.0, size_average=True, tile_rows=64))
    want3 = focal_loss_ref(x3, t3, None, gamma=2.0, size_average=True)
    assert jnp.allclose(got3, want3, rtol=1e-5, atol=1e-5), (got3, want3)

    print("KERNEL_OK")
</pallas_src>

<mosaic_0001>
module attributes {stable_mosaic.version = 11 : i64} {
  func.func @_focal_loss_kernel(%arg0: i32, %arg1: memref<16x16xf32, #tpu.memory_space<vmem>>, %arg2: memref<16x1xi32, #tpu.memory_space<vmem>>, %arg3: memref<1x1x1xf32, #tpu.memory_space<vmem>>) attributes {dimension_semantics = [#tpu.dimension_semantics<parallel>], iteration_bounds = array<i64: 1>, scalar_prefetch = 0 : i64, scratch_operands = 0 : i64, tpu.core_type = #tpu.core_type<tc>, window_params = [{transform_indices = @transform_0, window_bounds = array<i64: 16, 16>}, {transform_indices = @transform_1, window_bounds = array<i64: 16, 1>}, {transform_indices = @transform_2, window_bounds = array<i64: 1, 1, 1>}]} {
    %c0 = arith.constant 0 : index
    %c0_0 = arith.constant 0 : index
    %0 = vector.load %arg1[%c0, %c0_0] : memref<16x16xf32, #tpu.memory_space<vmem>>, vector<16x16xf32>
    %c0_1 = arith.constant 0 : index
    %c0_2 = arith.constant 0 : index
    %1 = vector.load %arg2[%c0_1, %c0_2] : memref<16x1xi32, #tpu.memory_space<vmem>>, vector<16x1xi32>
    %cst = arith.constant 1.000000e+00 : f32
    %2 = vector.broadcast %cst : f32 to vector<16x1xf32>
    %cst_3 = arith.constant dense<0xFF800000> : vector<16xf32>
    %3 = vector.multi_reduction <maximumf>, %0, %cst_3 [1] : vector<16x16xf32> to vector<16xf32>
    %4 = vector.shape_cast %3 : vector<16xf32> to vector<16x1xf32>
    %5 = vector.broadcast %4 : vector<16x1xf32> to vector<16x16xf32>
    %6 = arith.subf %0, %5 : vector<16x16xf32>
    %7 = math.exp %6 : vector<16x16xf32>
    %cst_4 = arith.constant dense<0.000000e+00> : vector<16x1xf32>
    %8 = tpu.matmul %7, %2, %cst_4 {dimension_numbers = #tpu.dot_dimension_numbers<[1], [0], [0], [1], [0, 0, 1, 1], [], []>} : vector<16x16xf32>, vector<16x1xf32>, vector<16x1xf32> -> vector<16x1xf32>
    %9 = math.log %8 : vector<16x1xf32>
    %10 = arith.addf %4, %9 : vector<16x1xf32>
    %11 = tpu.iota {dimensions = array<i32: 1>} : vector<16x16xi32>
    %12 = vector.broadcast %1 : vector<16x1xi32> to vector<16x16xi32>
    %13 = arith.cmpi eq, %11, %12 : vector<16x16xi32>
    %14 = arith.extui %13 : vector<16x16xi1> to vector<16x16xi32>
    %15 = arith.sitofp %14 : vector<16x16xi32> to vector<16x16xf32>
    %16 = arith.mulf %0, %15 : vector<16x16xf32>
    %cst_5 = arith.constant dense<0.000000e+00> : vector<16x1xf32>
    %17 = tpu.matmul %16, %2, %cst_5 {dimension_numbers = #tpu.dot_dimension_numbers<[1], [0], [0], [1], [0, 0, 1, 1], [], []>} : vector<16x16xf32>, vector<16x1xf32>, vector<16x1xf32> -> vector<16x1xf32>
    %18 = arith.subf %17, %10 : vector<16x1xf32>
    %cst_6 = arith.constant -13.8155107 : f32
    %cst_7 = arith.constant 0.000000e+00 : f32
    %19 = vector.broadcast %cst_6 : f32 to vector<16x1xf32>
    %20 = arith.maximumf %19, %18 : vector<16x1xf32>
    %21 = vector.broadcast %cst_7 : f32 to vector<16x1xf32>
    %22 = arith.minimumf %21, %20 : vector<16x1xf32>
    %23 = math.exp %22 : vector<16x1xf32>
    %cst_8 = arith.constant 1.000000e+00 : f32
    %24 = vector.broadcast %cst_8 : f32 to vector<16x1xf32>
    %25 = arith.subf %24, %23 : vector<16x1xf32>
    %26 = arith.mulf %25, %25 : vector<16x1xf32>
    %27 = arith.mulf %26, %22 : vector<16x1xf32>
    %cst_9 = arith.constant 0.000000e+00 : f32
    %28 = vector.broadcast %cst_9 : f32 to vector<16x1xf32>
    %29 = arith.subf %28, %27 : vector<16x1xf32>
    %c16_i32 = arith.constant 16 : i32
    %30 = arith.muli %arg0, %c16_i32 : i32
    %31 = tpu.iota {dimensions = array<i32: 0>} : vector<16x1xi32>
    %32 = vector.broadcast %30 : i32 to vector<16x1xi32>
    %33 = arith.addi %32, %31 : vector<16x1xi32>
    %c12_i32 = arith.constant 12 : i32
    %34 = vector.broadcast %c12_i32 : i32 to vector<16x1xi32>
    %35 = arith.cmpi slt, %33, %34 : vector<16x1xi32>
    %cst_10 = arith.constant 0.000000e+00 : f32
    %36 = vector.broadcast %cst_10 : f32 to vector<16x1xf32>
    %37 = arith.select %35, %29, %36 : vector<16x1xi1>, vector<16x1xf32>
    %38 = vector.shape_cast %37 : vector<16x1xf32> to vector<1x16x1xf32>
    %cst_11 = arith.constant dense<0.000000e+00> : vector<1xf32>
    %39 = vector.multi_reduction <add>, %38, %cst_11 [1, 2] : vector<1x16x1xf32> to vector<1xf32>
    %40 = vector.shape_cast %39 : vector<1xf32> to vector<1x1x1xf32>
    %41 = vector.extract %40[0, 0, 0] : f32 from vector<1x1x1xf32>
    %42 = vector.broadcast %41 : f32 to vector<1x1x1xf32>
    %c0_12 = arith.constant 0 : index
    %c0_13 = arith.constant 0 : index
    %c0_14 = arith.constant 0 : index
    %43 = vector.load %arg3[%c0_12, %c0_13, %c0_14] : memref<1x1x1xf32, #tpu.memory_space<vmem>>, vector<1x1x1xf32>
    tpu.vector_store %arg3[%c0_12, %c0_13, %c0_14], %42 {strides = array<i32>} : memref<1x1x1xf32, #tpu.memory_space<vmem>>, vector<1x1x1xf32>,
    return
  }
  func.func @transform_0(%arg0: i32) -> (i32, i32) {
    %c0_i32 = arith.constant 0 : i32
    %c0_i32_0 = arith.constant 0 : i32
    return %arg0, %c0_i32 : i32, i32
  }
  func.func @transform_1(%arg0: i32) -> (i32, i32) {
    %c0_i32 = arith.constant 0 : i32
    %c0_i32_0 = arith.constant 0 : i32
    return %arg0, %c0_i32 : i32, i32
  }
  func.func @transform_2(%arg0: i32) -> (i32, i32, i32) {
    %c0_i32 = arith.constant 0 : i32
    %c0_i32_0 = arith.constant 0 : i32
    %c0_i32_1 = arith.constant 0 : i32
    return %arg0, %c0_i32, %c0_i32_0 : i32, i32, i32
  }
}

</mosaic_0001>

<llo_original>
// kernel: tpu_custom_call.1
$region0: #{tpu_custom_call.1}
  #allocation0 [shape = 'u32[]', space=smem, size = 0x4, offset = 0x4, fixed_abs, tag = 'smem constant byte address 0x4 - core index']
  #allocation1 [shape = 'u32[72,128]{1,0:T(1,128)}', space=vmem, size = 0x9000, scoped, tag = 'internal scratch']
  %s0 = inlined_call_operand.vmem [shape: f32[12,16], index: 0, kind: input, shape index: {}]
  %s1 = inlined_call_operand.vmem [shape: s32[12,1], index: 1, kind: input, shape index: {}]
  %s2 = inlined_call_operand.hbm [shape: f32[1,1,1], index: 2, kind: output, shape index: {}]
  %s3 = sld [smem:[#allocation0]]
  $region18: #{tpu_custom_call.1} parent=0
    _
  %s5 = ssub.s32 1, %s3
  %s6 = scalar_select 0, %s5, %s3
  $region1: #{tpu_custom_call.1} parent=0
    #allocation2 [shape = 'u8[512]{0}', space=vmem, size = 0x400, scoped, tag = 'output window, operand 0, single buffered']
    #allocation3 [shape = 's32[1]{0}', space=sflag, size = 0x4, scoped, tag = 'scoped memory for tpu_custom_call.1']
    %7 = vsyncpa [#allocation3], 0
    // Predicated region
    $region2: #{tpu_custom_call.1} parent=1 // pred_check
      _
    $region3: #{tpu_custom_call.1} parent=1 // pred_check_branch
      %9 = sbr.rel (0) target = $region5
    $region4: #{tpu_custom_call.1} parent=1 // pred_region
      _
    $region5: #{tpu_custom_call.1} parent=1 // pred_fallthru
      _
    // Predicated region
    $region6: #{tpu_custom_call.1} parent=1 // pred_check
      _
    $region7: #{tpu_custom_call.1} parent=1 // pred_check_branch
      %11 = sbr.rel (0) target = $region9
    $region8: #{tpu_custom_call.1} parent=1 // pred_region
      _
    $region9: #{tpu_custom_call.1} parent=1 // pred_fallthru
      _
    %v12 = vld [vmem:[%s0] sm:$0xff]
    %v13 = vld [vmem:[%s0 + $0x8] sm:$0xff]
    %v14 = vld [vmem:[%s1] sm:$0xff]
    %v15 = vld [vmem:[%s1 + $0x8] sm:$0xff]
    %vm16 = vcmask 130048
    %v17 = vsel %vm16, %v12, -inf
    %18 = vmax.xlane.f32.xlu0 %v17
    %v19 = vpop.xlane.xlu0 %18
    %v20 = vsel %vm16, %v13, -inf
    %21 = vmax.xlane.f32.xlu0 %v20
    %v22 = vpop.xlane.xlu0 %21
    %v23 = vsub.f32 %v12, %v19
    %v24 = vsub.f32 %v13, %v22
    %v25 = vmul.f32 %v23, 1.442695
    %v26 = vpow.pop %v25
    %v27 = vmul.f32 %v24, 1.442695
    %v28 = vpow.pop %v27
    %v30 = vsel %vm16, %v26, 0
    %v33 = vsel %vm16, %v28, 0
    %35 = vmatpush.msra.mxu0 0.0
    %36 = vmatpush.msra.mxu0 0.0
    %37 = vmatpush.msra.mxu0 0.0
    %38 = vmatpush.msra.mxu0 0.0
    %39 = vmatpush.msra.mxu0 0.0
    %40 = vmatpush.msra.mxu0 0.0
    %41 = vmatpush.msra.mxu0 0.0
    %42 = vmatpush.msra.mxu0 0.0
    %43 = vmatpush.msra.mxu0 0.0
    %44 = vmatpush.msra.mxu0 0.0
    %45 = vmatpush.msra.mxu0 0.0
    %46 = vmatpush.msra.mxu0 0.0
    %47 = vmatpush.msra.mxu0 0.0
    %48 = vmatpush.msra.mxu0 0.0
    %49 = vmatpush.msra.mxu0 1.0
    %50 = vmatpush.msra.mxu0 1.0
    %51 = vmatmul.f32.gmra.mxu0 %v30
    %v52 = vpop.f32.mrf.mxu0
    %v53 = vadd.f32 0.0, %v52
    %54 = vmatmul.f32.gmra.mxu0 %v33
    %v55 = vpop.f32.mrf.mxu0
    %v56 = vadd.f32 0.0, %v55
    %57 = vdwg.mxu0
    %v58 = vlog2.pop %v53
    %v59 = vmul.f32 %v58, 0.6931472
    %v60 = vlog2.pop %v56
    %v61 = vmul.f32 %v60, 0.6931472
    %v62 = vadd.f32 %v19, %v59
    %v63 = vadd.f32 %v22, %v61
    %v64 = vlaneseq
    %v65 = vand.u32 %v64, 127
    %66 = vset.pattern.permute.xlu0 0
    %67 = vperm.xlu0 %66, %v14
    %v68 = vpop.permute.xlu0 %67
    %69 = vset.pattern.permute.xlu0 0
    %70 = vperm.xlu0 %69, %v15
    %v71 = vpop.permute.xlu0 %70
    %vm72 = vcmp.eq.s32.totalorder %v65, %v68
    %vm73 = vcmp.eq.s32.totalorder %v65, %v71
    %v74 = vsel %vm72, 1, 0
    %v75 = vsel %vm73, 1, 0
    %v76 = vcvt.s32.f32 %v74
    %v77 = vcvt.s32.f32 %v75
    %v78 = vmul.f32 %v12, %v76
    %v79 = vmul.f32 %v13, %v77
    %v81 = vsel %vm16, %v78, 0
    %v84 = vsel %vm16, %v79, 0
    %86 = vmatpush.msra.mxu0 0.0
    %87 = vmatpush.msra.mxu0 0.0
    %88 = vmatpush.msra.mxu0 0.0
    %89 = vmatpush.msra.mxu0 0.0
    %90 = vmatpush.msra.mxu0 0.0
    %91 = vmatpush.msra.mxu0 0.0
    %92 = vmatpush.msra.mxu0 0.0
    %93 = vmatpush.msra.mxu0 0.0
    %94 = vmatpush.msra.mxu0 0.0
    %95 = vmatpush.msra.mxu0 0.0
    %96 = vmatpush.msra.mxu0 0.0
    %97 = vmatpush.msra.mxu0 0.0
    %98 = vmatpush.msra.mxu0 0.0
    %99 = vmatpush.msra.mxu0 0.0
    %100 = vmatpush.msra.mxu0 1.0
    %101 = vmatpush.msra.mxu0 1.0
    %102 = vmatmul.f32.gmra.mxu0 %v81
    %v103 = vpop.f32.mrf.mxu0
    %v104 = vadd.f32 0.0, %v103
    %105 = vmatmul.f32.gmra.mxu0 %v84
    %v106 = vpop.f32.mrf.mxu0
    %v107 = vadd.f32 0.0, %v106
    %108 = vdwg.mxu0
    %v109 = vsub.f32 %v104, %v62
    %v110 = vsub.f32 %v107, %v63
    %v111 = vmax.f32 %v109, -13.815511
    %v112 = vmax.f32 %v110, -13.815511
    %v113 = vmin.f32 %v111, 0.0
    %v114 = vmin.f32 %v112, 0.0
    %v115 = vmul.f32 %v113, 1.442695
    %v116 = vpow.pop %v115
    %v117 = vmul.f32 %v114, 1.442695
    %v118 = vpow.pop %v117
    %v119 = vsub.f32 1.0, %v116
    %v120 = vsub.f32 1.0, %v118
    %v121 = vmul.f32 %v119, %v119
    %v122 = vmul.f32 %v120, %v120
    %v123 = vmul.f32 %v121, %v113
    %v124 = vmul.f32 %v122, %v114
    %v125 = vsub.f32 0.0, %v123
    %v126 = vsub.f32 0.0, %v124
    %s127 = smul.u32 0, 16
    %v128 = vlaneseq
    %v129 = vshrl.u32 %v128, 7
    %v130 = vadd.s32 %v129, 8
    %v131 = vstv %s127
    %v132 = vadd.s32 %v131, %v129
    %v133 = vadd.s32 %v131, %v130
    %vm134 = vcmp.lt.s32.totalorder %v132, 12
    %vm135 = vcmp.lt.s32.totalorder %v133, 12
    %v136 = vsel %vm134, %v125, 0.0
    %v137 = vsel %vm135, %v126, 0.0
    %vm138 = vcmask 7168
    %v139 = vsel %vm138, %v136, 0.0
    %v140 = vsel %vm138, %v137, 0.0
    %v141 = vadd.f32 %v139, %v140
    %142 = vadd.xlane.f32.xlu0 %v141
    %v143 = vpop.xlane.xlu0 %142
    %v144 = vrot.slane %v143, 4
    %v145 = vadd.f32 %v143, %v144
    %v146 = vrot.slane %v145, 2
    %v147 = vadd.f32 %v145, %v146
    %v148 = vrot.slane %v147, 1
    %v149 = vadd.f32 %v147, %v148
    %s150 = vtos %v149
    %v151 = vstv %s150
    %vm152 = vcmask 0
    %153 = vst.msk [vmem:[#allocation2] sm:$0x1] %vm152, %v151
    // Predicated region
    $region10: #{tpu_custom_call.1} parent=1 // pred_check
      _
    $region11: #{tpu_custom_call.1} parent=1 // pred_check_branch
      %155 = sbr.rel (0) target = $region13
    $region12: #{tpu_custom_call.1} parent=1 // pred_region
      %157 = vsyncadd [#allocation3], 0
      %s159 = sshll.u32 [#allocation2], 4
      %s160 = int_to_ptr.vmem [resolvable:$true] %s159
      %s161 = sshll.u32 %s2, 4
      %s162 = int_to_ptr.hbm [resolvable:$true] %s161
      %164 = dma.vmem_to_hbm [thread:$0]  %s160, 16, %s162, [#allocation3]
    $region13: #{tpu_custom_call.1} parent=1 // pred_fallthru
      _
    // Predicated region
    $region14: #{tpu_custom_call.1} parent=1 // pred_check
      _
    $region15: #{tpu_custom_call.1} parent=1 // pred_check_branch
      %166 = sbr.rel (0) target = $region17
    $region16: #{tpu_custom_call.1} parent=1 // pred_region
      %168 = dma.done [#allocation3], 16
    $region17: #{tpu_custom_call.1} parent=1 // pred_fallthru
      _
    %169 = vsyncpa [#allocation3], 1

</llo_original>
